<compile_context>
chip_gen: v7x
topology: tpu7x:2x2x1
jax: 0.10.0
libtpu: 0.0.40
codegen_flags: <defaults>
</compile_context>

<pallas_src>
import jax
import jax.numpy as jnp
from jax.experimental import pallas as pl
from jax.experimental.pallas import tpu as pltpu

# Row layout of the packed parameter slab (16, 128):
#   rows 0..1  : w1 (2 x 5), transposed Linear weight, zero-padded to 128 lanes
#   row  2     : b1 (5,)
#   rows 3..7  : w2 (5 x 5)
#   row  8     : b2 (5,)
#   rows 9..13 : w3 (5 x 2)
#   row  14    : b3 (2,)
#   row  15    : unused padding (sublane alignment to 16)
_R_W1, _R_B1, _R_W2, _R_B2, _R_W3, _R_B3 = 0, 2, 3, 8, 9, 14


def _sigmoid(h):
    # tanh form: single EUP transcendental, no divide on the VALU critical path.
    return 0.5 * (jnp.tanh(0.5 * h) + 1.0)


def _row(p_ref, r):
    # Per-row vector load straight from VMEM (no slab materialization + XLU slicing).
    return p_ref[r:r + 1, :]                        # (1, 128)


def xor_kernel(x_ref, p_ref, o_ref):
    x = x_ref[...]                                  # (B, 2) float32

    # ---- layer1 + sigmoid: bias folded into one partial, 2-way tree ----
    a0 = x[:, 0:1]                                  # hoisted lane-broadcast sources
    a1 = x[:, 1:2]
    s0 = _row(p_ref, _R_B1) + a0 * _row(p_ref, _R_W1 + 0)
    s1 = a1 * _row(p_ref, _R_W1 + 1)
    h = _sigmoid(s0 + s1)                           # (B, 128); lanes >=5 are 0-derived

    # ---- layer2 + sigmoid: 5-term FMA, split even/odd partial sums ----
    b0 = h[:, 0:1]
    b1 = h[:, 1:2]
    b2 = h[:, 2:3]
    b3 = h[:, 3:4]
    b4 = h[:, 4:5]
    s0 = _row(p_ref, _R_B2) + b0 * _row(p_ref, _R_W2 + 0)
    s1 = b1 * _row(p_ref, _R_W2 + 1)
    s0 = s0 + b2 * _row(p_ref, _R_W2 + 2)
    s1 = s1 + b3 * _row(p_ref, _R_W2 + 3)
    s0 = s0 + b4 * _row(p_ref, _R_W2 + 4)
    h2 = _sigmoid(s0 + s1)                          # (B, 128)

    # ---- layer3: 5-term FMA, split even/odd partial sums ----
    c0 = h2[:, 0:1]
    c1 = h2[:, 1:2]
    c2 = h2[:, 2:3]
    c3 = h2[:, 3:4]
    c4 = h2[:, 4:5]
    s0 = _row(p_ref, _R_B3) + c0 * _row(p_ref, _R_W3 + 0)
    s1 = c1 * _row(p_ref, _R_W3 + 1)
    s0 = s0 + c2 * _row(p_ref, _R_W3 + 2)
    s1 = s1 + c3 * _row(p_ref, _R_W3 + 3)
    s0 = s0 + c4 * _row(p_ref, _R_W3 + 4)
    y = s0 + s1                                     # (B, 128) logits; lanes >=2 are 0

    # ---- softmax over dim=0 (batch axis) at full lane width (lane-dense store) ----
    # Padded lanes are exactly 0 for every row -> exp(0)=1, denom=B: finite, sliced
    # off in the wrapper.
    m = jnp.max(y, axis=0, keepdims=True)
    e = jnp.exp(y - m)
    denom = jnp.sum(e, axis=0, keepdims=True)
    o_ref[...] = e * pl.reciprocal(denom, approx=False)


def xor_forward(x, param_slab):
    B = x.shape[0]
    vmem = pl.BlockSpec(memory_space=pltpu.MemorySpace.VMEM)
    out_full = pl.pallas_call(
        xor_kernel,
        out_shape=jax.ShapeDtypeStruct((B, 128), jnp.float32),
        in_specs=[vmem, vmem],
        out_specs=vmem,
    )(x, param_slab)
    return out_full[:, :2]                          # lane-dense store, slice in XLA


def init_params(key):
    """Deterministic init mirroring nn.Linear shapes: (2->5), (5->5), (5->2)."""
    ks = jax.random.split(key, 6)

    def linear(kw, kb, in_f, out_f):
        bound = 1.0 / jnp.sqrt(in_f)
        # PyTorch stores W as (out_f, in_f); we keep the transposed (in_f, out_f) form.
        w = jax.random.uniform(kw, (in_f, out_f), jnp.float32, -bound, bound)
        b = jax.random.uniform(kb, (out_f,), jnp.float32, -bound, bound)
        return w, b

    w1, b1 = linear(ks[0], ks[1], 2, 5)
    w2, b2 = linear(ks[2], ks[3], 5, 5)
    w3, b3 = linear(ks[4], ks[5], 5, 2)
    return (w1, b1, w2, b2, w3, b3)


def pack_params(params):
    """Pack all weights/biases into a single (16, 128) f32 slab (one VMEM DMA)."""
    w1, b1, w2, b2, w3, b3 = params
    slab = jnp.zeros((16, 128), jnp.float32)
    slab = slab.at[_R_W1:_R_W1 + 2, 0:5].set(w1)
    slab = slab.at[_R_B1, 0:5].set(b1)
    slab = slab.at[_R_W2:_R_W2 + 5, 0:5].set(w2)
    slab = slab.at[_R_B2, 0:5].set(b2)
    slab = slab.at[_R_W3:_R_W3 + 5, 0:2].set(w3)
    slab = slab.at[_R_B3, 0:2].set(b3)
    return slab


def reference_forward(x, params):
    w1, b1, w2, b2, w3, b3 = params
    h = jax.nn.sigmoid(x @ w1 + b1)
    h = jax.nn.sigmoid(h @ w2 + b2)
    h = h @ w3 + b3
    return jax.nn.softmax(h, axis=0)


if __name__ == "__main__":
    key = jax.random.PRNGKey(0)
    k_x, k_p = jax.random.split(key)
    B = 8  # small batch of XOR-style 2-feature inputs
    x = jax.random.uniform(k_x, (B, 2), jnp.float32)

    params = init_params(k_p)
    slab = pack_params(params)

    out = xor_forward(x, slab)
    out = jax.block_until_ready(out)

    ref = reference_forward(x, params)
    assert out.shape == (B, 2)
    assert jnp.allclose(out, ref, atol=1e-5, rtol=1e-5), "mismatch vs reference"

    print("KERNEL_OK")
</pallas_src>

<mosaic_0001>
module attributes {stable_mosaic.version = 11 : i64} {
  func.func @xor_kernel(%arg0: memref<8x2xf32, #tpu.memory_space<vmem>>, %arg1: memref<16x128xf32, #tpu.memory_space<vmem>>, %arg2: memref<8x128xf32, #tpu.memory_space<vmem>>) attributes {dimension_semantics = [], scalar_prefetch = 0 : i64, scratch_operands = 0 : i64, tpu.core_type = #tpu.core_type<tc>} {
    %c0 = arith.constant 0 : index
    %c0_0 = arith.constant 0 : index
    %0 = vector.load %arg0[%c0, %c0_0] : memref<8x2xf32, #tpu.memory_space<vmem>>, vector<8x2xf32>
    %1 = vector.extract_strided_slice %0 {offsets = [0, 0], sizes = [8, 1], strides = [1, 1]} : vector<8x2xf32> to vector<8x1xf32>
    %2 = vector.extract_strided_slice %0 {offsets = [0, 1], sizes = [8, 1], strides = [1, 1]} : vector<8x2xf32> to vector<8x1xf32>
    %c2 = arith.constant 2 : index
    %c0_1 = arith.constant 0 : index
    %3 = vector.load %arg1[%c2, %c0_1] : memref<16x128xf32, #tpu.memory_space<vmem>>, vector<1x128xf32>
    %c0_2 = arith.constant 0 : index
    %c0_3 = arith.constant 0 : index
    %4 = vector.load %arg1[%c0_2, %c0_3] : memref<16x128xf32, #tpu.memory_space<vmem>>, vector<1x128xf32>
    %5 = vector.broadcast %1 : vector<8x1xf32> to vector<8x128xf32>
    %6 = vector.broadcast %4 : vector<1x128xf32> to vector<8x128xf32>
    %7 = arith.mulf %5, %6 : vector<8x128xf32>
    %8 = vector.broadcast %3 : vector<1x128xf32> to vector<8x128xf32>
    %9 = arith.addf %8, %7 : vector<8x128xf32>
    %c1 = arith.constant 1 : index
    %c0_4 = arith.constant 0 : index
    %10 = vector.load %arg1[%c1, %c0_4] : memref<16x128xf32, #tpu.memory_space<vmem>>, vector<1x128xf32>
    %11 = vector.broadcast %2 : vector<8x1xf32> to vector<8x128xf32>
    %12 = vector.broadcast %10 : vector<1x128xf32> to vector<8x128xf32>
    %13 = arith.mulf %11, %12 : vector<8x128xf32>
    %14 = arith.addf %9, %13 : vector<8x128xf32>
    %cst = arith.constant 5.000000e-01 : f32
    %15 = vector.broadcast %cst : f32 to vector<8x128xf32>
    %16 = arith.mulf %15, %14 : vector<8x128xf32>
    %17 = math.tanh %16 : vector<8x128xf32>
    %cst_5 = arith.constant 1.000000e+00 : f32
    %18 = vector.broadcast %cst_5 : f32 to vector<8x128xf32>
    %19 = arith.addf %17, %18 : vector<8x128xf32>
    %cst_6 = arith.constant 5.000000e-01 : f32
    %20 = vector.broadcast %cst_6 : f32 to vector<8x128xf32>
    %21 = arith.mulf %20, %19 : vector<8x128xf32>
    %22 = vector.extract_strided_slice %21 {offsets = [0, 0], sizes = [8, 1], strides = [1, 1]} : vector<8x128xf32> to vector<8x1xf32>
    %23 = vector.extract_strided_slice %21 {offsets = [0, 1], sizes = [8, 1], strides = [1, 1]} : vector<8x128xf32> to vector<8x1xf32>
    %24 = vector.extract_strided_slice %21 {offsets = [0, 2], sizes = [8, 1], strides = [1, 1]} : vector<8x128xf32> to vector<8x1xf32>
    %25 = vector.extract_strided_slice %21 {offsets = [0, 3], sizes = [8, 1], strides = [1, 1]} : vector<8x128xf32> to vector<8x1xf32>
    %26 = vector.extract_strided_slice %21 {offsets = [0, 4], sizes = [8, 1], strides = [1, 1]} : vector<8x128xf32> to vector<8x1xf32>
    %c8 = arith.constant 8 : index
    %c0_7 = arith.constant 0 : index
    %27 = vector.load %arg1[%c8, %c0_7] : memref<16x128xf32, #tpu.memory_space<vmem>>, vector<1x128xf32>
    %c3 = arith.constant 3 : index
    %c0_8 = arith.constant 0 : index
    %28 = vector.load %arg1[%c3, %c0_8] : memref<16x128xf32, #tpu.memory_space<vmem>>, vector<1x128xf32>
    %29 = vector.broadcast %22 : vector<8x1xf32> to vector<8x128xf32>
    %30 = vector.broadcast %28 : vector<1x128xf32> to vector<8x128xf32>
    %31 = arith.mulf %29, %30 : vector<8x128xf32>
    %32 = vector.broadcast %27 : vector<1x128xf32> to vector<8x128xf32>
    %33 = arith.addf %32, %31 : vector<8x128xf32>
    %c4 = arith.constant 4 : index
    %c0_9 = arith.constant 0 : index
    %34 = vector.load %arg1[%c4, %c0_9] : memref<16x128xf32, #tpu.memory_space<vmem>>, vector<1x128xf32>
    %35 = vector.broadcast %23 : vector<8x1xf32> to vector<8x128xf32>
    %36 = vector.broadcast %34 : vector<1x128xf32> to vector<8x128xf32>
    %37 = arith.mulf %35, %36 : vector<8x128xf32>
    %c5 = arith.constant 5 : index
    %c0_10 = arith.constant 0 : index
    %38 = vector.load %arg1[%c5, %c0_10] : memref<16x128xf32, #tpu.memory_space<vmem>>, vector<1x128xf32>
    %39 = vector.broadcast %24 : vector<8x1xf32> to vector<8x128xf32>
    %40 = vector.broadcast %38 : vector<1x128xf32> to vector<8x128xf32>
    %41 = arith.mulf %39, %40 : vector<8x128xf32>
    %42 = arith.addf %33, %41 : vector<8x128xf32>
    %c6 = arith.constant 6 : index
    %c0_11 = arith.constant 0 : index
    %43 = vector.load %arg1[%c6, %c0_11] : memref<16x128xf32, #tpu.memory_space<vmem>>, vector<1x128xf32>
    %44 = vector.broadcast %25 : vector<8x1xf32> to vector<8x128xf32>
    %45 = vector.broadcast %43 : vector<1x128xf32> to vector<8x128xf32>
    %46 = arith.mulf %44, %45 : vector<8x128xf32>
    %47 = arith.addf %37, %46 : vector<8x128xf32>
    %c7 = arith.constant 7 : index
    %c0_12 = arith.constant 0 : index
    %48 = vector.load %arg1[%c7, %c0_12] : memref<16x128xf32, #tpu.memory_space<vmem>>, vector<1x128xf32>
    %49 = vector.broadcast %26 : vector<8x1xf32> to vector<8x128xf32>
    %50 = vector.broadcast %48 : vector<1x128xf32> to vector<8x128xf32>
    %51 = arith.mulf %49, %50 : vector<8x128xf32>
    %52 = arith.addf %42, %51 : vector<8x128xf32>
    %53 = arith.addf %52, %47 : vector<8x128xf32>
    %cst_13 = arith.constant 5.000000e-01 : f32
    %54 = vector.broadcast %cst_13 : f32 to vector<8x128xf32>
    %55 = arith.mulf %54, %53 : vector<8x128xf32>
    %56 = math.tanh %55 : vector<8x128xf32>
    %cst_14 = arith.constant 1.000000e+00 : f32
    %57 = vector.broadcast %cst_14 : f32 to vector<8x128xf32>
    %58 = arith.addf %56, %57 : vector<8x128xf32>
    %cst_15 = arith.constant 5.000000e-01 : f32
    %59 = vector.broadcast %cst_15 : f32 to vector<8x128xf32>
    %60 = arith.mulf %59, %58 : vector<8x128xf32>
    %61 = vector.extract_strided_slice %60 {offsets = [0, 0], sizes = [8, 1], strides = [1, 1]} : vector<8x128xf32> to vector<8x1xf32>
    %62 = vector.extract_strided_slice %60 {offsets = [0, 1], sizes = [8, 1], strides = [1, 1]} : vector<8x128xf32> to vector<8x1xf32>
    %63 = vector.extract_strided_slice %60 {offsets = [0, 2], sizes = [8, 1], strides = [1, 1]} : vector<8x128xf32> to vector<8x1xf32>
    %64 = vector.extract_strided_slice %60 {offsets = [0, 3], sizes = [8, 1], strides = [1, 1]} : vector<8x128xf32> to vector<8x1xf32>
    %65 = vector.extract_strided_slice %60 {offsets = [0, 4], sizes = [8, 1], strides = [1, 1]} : vector<8x128xf32> to vector<8x1xf32>
    %c14 = arith.constant 14 : index
    %c0_16 = arith.constant 0 : index
    %66 = vector.load %arg1[%c14, %c0_16] : memref<16x128xf32, #tpu.memory_space<vmem>>, vector<1x128xf32>
    %c9 = arith.constant 9 : index
    %c0_17 = arith.constant 0 : index
    %67 = vector.load %arg1[%c9, %c0_17] : memref<16x128xf32, #tpu.memory_space<vmem>>, vector<1x128xf32>
    %68 = vector.broadcast %61 : vector<8x1xf32> to vector<8x128xf32>
    %69 = vector.broadcast %67 : vector<1x128xf32> to vector<8x128xf32>
    %70 = arith.mulf %68, %69 : vector<8x128xf32>
    %71 = vector.broadcast %66 : vector<1x128xf32> to vector<8x128xf32>
    %72 = arith.addf %71, %70 : vector<8x128xf32>
    %c10 = arith.constant 10 : index
    %c0_18 = arith.constant 0 : index
    %73 = vector.load %arg1[%c10, %c0_18] : memref<16x128xf32, #tpu.memory_space<vmem>>, vector<1x128xf32>
    %74 = vector.broadcast %62 : vector<8x1xf32> to vector<8x128xf32>
    %75 = vector.broadcast %73 : vector<1x128xf32> to vector<8x128xf32>
    %76 = arith.mulf %74, %75 : vector<8x128xf32>
    %c11 = arith.constant 11 : index
    %c0_19 = arith.constant 0 : index
    %77 = vector.load %arg1[%c11, %c0_19] : memref<16x128xf32, #tpu.memory_space<vmem>>, vector<1x128xf32>
    %78 = vector.broadcast %63 : vector<8x1xf32> to vector<8x128xf32>
    %79 = vector.broadcast %77 : vector<1x128xf32> to vector<8x128xf32>
    %80 = arith.mulf %78, %79 : vector<8x128xf32>
    %81 = arith.addf %72, %80 : vector<8x128xf32>
    %c12 = arith.constant 12 : index
    %c0_20 = arith.constant 0 : index
    %82 = vector.load %arg1[%c12, %c0_20] : memref<16x128xf32, #tpu.memory_space<vmem>>, vector<1x128xf32>
    %83 = vector.broadcast %64 : vector<8x1xf32> to vector<8x128xf32>
    %84 = vector.broadcast %82 : vector<1x128xf32> to vector<8x128xf32>
    %85 = arith.mulf %83, %84 : vector<8x128xf32>
    %86 = arith.addf %76, %85 : vector<8x128xf32>
    %c13 = arith.constant 13 : index
    %c0_21 = arith.constant 0 : index
    %87 = vector.load %arg1[%c13, %c0_21] : memref<16x128xf32, #tpu.memory_space<vmem>>, vector<1x128xf32>
    %88 = vector.broadcast %65 : vector<8x1xf32> to vector<8x128xf32>
    %89 = vector.broadcast %87 : vector<1x128xf32> to vector<8x128xf32>
    %90 = arith.mulf %88, %89 : vector<8x128xf32>
    %91 = arith.addf %81, %90 : vector<8x128xf32>
    %92 = arith.addf %91, %86 : vector<8x128xf32>
    %cst_22 = arith.constant dense<0xFF800000> : vector<128xf32>
    %93 = vector.multi_reduction <maximumf>, %92, %cst_22 [0] : vector<8x128xf32> to vector<128xf32>
    %94 = vector.shape_cast %93 : vector<128xf32> to vector<1x128xf32>
    %95 = vector.broadcast %94 : vector<1x128xf32> to vector<8x128xf32>
    %96 = arith.subf %92, %95 : vector<8x128xf32>
    %97 = math.exp %96 : vector<8x128xf32>
    %cst_23 = arith.constant dense<0.000000e+00> : vector<128xf32>
    %98 = vector.multi_reduction <add>, %97, %cst_23 [0] : vector<8x128xf32> to vector<128xf32>
    %99 = vector.shape_cast %98 : vector<128xf32> to vector<1x128xf32>
    %100 = tpu.reciprocal %99 : vector<1x128xf32> -> vector<1x128xf32>
    %101 = vector.broadcast %100 : vector<1x128xf32> to vector<8x128xf32>
    %102 = arith.mulf %97, %101 : vector<8x128xf32>
    %c0_24 = arith.constant 0 : index
    %c0_25 = arith.constant 0 : index
    %103 = vector.load %arg2[%c0_24, %c0_25] : memref<8x128xf32, #tpu.memory_space<vmem>>, vector<8x128xf32>
    tpu.vector_store %arg2[%c0_24, %c0_25], %102 {strides = array<i32>} : memref<8x128xf32, #tpu.memory_space<vmem>>, vector<8x128xf32>,
    return
  }
}

</mosaic_0001>

<llo_original>
// kernel: tpu_custom_call.1
$region0: #{tpu_custom_call.1}
  #allocation0 [shape = 'u32[]', space=smem, size = 0x4, offset = 0x4, fixed_abs, tag = 'smem constant byte address 0x4 - core index']
  #allocation1 [shape = 'u32[144,128]{1,0:T(1,128)}', space=vmem, size = 0x12000, scoped, tag = 'internal scratch']
  %s0 = inlined_call_operand.vmem [shape: f32[8,2], index: 0, kind: input, shape index: {}]
  %s1 = inlined_call_operand.hbm [shape: f32[16,128], index: 1, kind: input, shape index: {}]
  %s2 = inlined_call_operand.hbm [shape: f32[8,128], index: 2, kind: output, shape index: {}]
  %s3 = sld [smem:[#allocation0]]
  $region22: #{tpu_custom_call.1} parent=0
    _
  %s5 = ssub.s32 1, %s3
  %s6 = scalar_select 0, %s5, %s3
  $region1: #{tpu_custom_call.1} parent=0
    #allocation2 [shape = 'u8[8192]{0}', space=vmem, size = 0x2000, scoped, tag = 'input window, operand 1, single buffered']
    #allocation3 [shape = 's32[1]{0}', space=sflag, size = 0x4, scoped, tag = 'scoped memory for tpu_custom_call.1']
    #allocation4 [shape = 's32[1]{0}', space=sflag, size = 0x4, scoped, tag = 'scoped memory for tpu_custom_call.1']
    #allocation5 [shape = 'u8[4096]{0}', space=vmem, size = 0x1000, scoped, tag = 'output window, operand 0, single buffered']
    %7 = vsyncpa [#allocation3], 0
    %8 = vsyncpa [#allocation4], 0
    // Predicated region
    $region2: #{tpu_custom_call.1} parent=1 // pred_check
      _
    $region3: #{tpu_custom_call.1} parent=1 // pred_check_branch
      %10 = sbr.rel (0) target = $region5
    $region4: #{tpu_custom_call.1} parent=1 // pred_region
      _
    $region5: #{tpu_custom_call.1} parent=1 // pred_fallthru
      _
    // Predicated region
    $region6: #{tpu_custom_call.1} parent=1 // pred_check
      _
    $region7: #{tpu_custom_call.1} parent=1 // pred_check_branch
      %12 = sbr.rel (0) target = $region9
    $region8: #{tpu_custom_call.1} parent=1 // pred_region
      %s14 = ssub.s32 256, 256
      %15 = vsyncadd [#allocation3], %s14
      %s16 = sshll.u32 [#allocation2], 4
      %s17 = int_to_ptr.vmem [resolvable:$true] %s16
      %22 = dma.hbm_to_vmem [thread:$0]  %s1, 256, %s17, [#allocation3], 128, 128, 8
    $region9: #{tpu_custom_call.1} parent=1 // pred_fallthru
      _
    // Predicated region
    $region10: #{tpu_custom_call.1} parent=1 // pred_check
      _
    $region11: #{tpu_custom_call.1} parent=1 // pred_check_branch
      %24 = sbr.rel (0) target = $region13
    $region12: #{tpu_custom_call.1} parent=1 // pred_region
      %25 = dma.done [#allocation3], 256
    $region13: #{tpu_custom_call.1} parent=1 // pred_fallthru
      _
    %v26 = vld [vmem:[%s0] sm:$0xff]
    %v27 = vld [vmem:[#allocation2 + $0x2] sm:$0x1]
    %v28 = vld [vmem:[#allocation2] sm:$0x1]
    %30 = vset.pattern.permute.xlu0 0
    %31 = vperm.xlu0 %30, %v26
    %v32 = vpop.permute.xlu0 %31
    %v34 = vlaneseq
    %v35 = vshrl.u32 %v34, 7
    %v36 = vsub.s32 0, %v35
    %v37 = vrot.slane %v28, %v36
    %v38 = vmul.f32 %v32, %v37
    %v39 = vlaneseq
    %v40 = vshrl.u32 %v39, 7
    %v41 = vsub.s32 0, %v40
    %v42 = vrot.slane %v27, %v41
    %v43 = vadd.f32 %v42, %v38
    %v44 = vld [vmem:[#allocation2 + $0x1] sm:$0x1]
    %45 = vset.pattern.permute.xlu0 1
    %46 = vperm.xlu0 %45, %v26
    %v47 = vpop.permute.xlu0 %46
    %v49 = vlaneseq
    %v50 = vshrl.u32 %v49, 7
    %v51 = vsub.s32 0, %v50
    %v52 = vrot.slane %v44, %v51
    %v53 = vmul.f32 %v47, %v52
    %v54 = vadd.f32 %v43, %v53
    %v55 = vmul.f32 %v54, 0.5
    %v56 = vtanh.pop %v55
    %v57 = vadd.f32 %v56, 1.0
    %v58 = vmul.f32 %v57, 0.5
    %v59 = vld [vmem:[#allocation2 + $0x8] sm:$0x1]
    %v60 = vld [vmem:[#allocation2 + $0x3] sm:$0x1]
    %62 = vset.pattern.permute.xlu0 0
    %63 = vperm.xlu0 %62, %v58
    %v64 = vpop.permute.xlu0 %63
    %v66 = vlaneseq
    %v67 = vshrl.u32 %v66, 7
    %v68 = vsub.s32 0, %v67
    %v69 = vrot.slane %v60, %v68
    %v70 = vmul.f32 %v64, %v69
    %v71 = vlaneseq
    %v72 = vshrl.u32 %v71, 7
    %v73 = vsub.s32 0, %v72
    %v74 = vrot.slane %v59, %v73
    %v75 = vadd.f32 %v74, %v70
    %v76 = vld [vmem:[#allocation2 + $0x4] sm:$0x1]
    %77 = vset.pattern.permute.xlu0 1
    %78 = vperm.xlu0 %77, %v58
    %v79 = vpop.permute.xlu0 %78
    %v81 = vlaneseq
    %v82 = vshrl.u32 %v81, 7
    %v83 = vsub.s32 0, %v82
    %v84 = vrot.slane %v76, %v83
    %v85 = vmul.f32 %v79, %v84
    %v86 = vld [vmem:[#allocation2 + $0x5] sm:$0x1]
    %87 = vset.pattern.permute.xlu0 2
    %88 = vperm.xlu0 %87, %v58
    %v89 = vpop.permute.xlu0 %88
    %v91 = vlaneseq
    %v92 = vshrl.u32 %v91, 7
    %v93 = vsub.s32 0, %v92
    %v94 = vrot.slane %v86, %v93
    %v95 = vmul.f32 %v89, %v94
    %v96 = vadd.f32 %v75, %v95
    %v97 = vld [vmem:[#allocation2 + $0x6] sm:$0x1]
    %98 = vset.pattern.permute.xlu0 3
    %99 = vperm.xlu0 %98, %v58
    %v100 = vpop.permute.xlu0 %99
    %v102 = vlaneseq
    %v103 = vshrl.u32 %v102, 7
    %v104 = vsub.s32 0, %v103
    %v105 = vrot.slane %v97, %v104
    %v106 = vmul.f32 %v100, %v105
    %v107 = vadd.f32 %v85, %v106
    %v108 = vld [vmem:[#allocation2 + $0x7] sm:$0x1]
    %109 = vset.pattern.permute.xlu0 4
    %110 = vperm.xlu0 %109, %v58
    %v111 = vpop.permute.xlu0 %110
    %v113 = vlaneseq
    %v114 = vshrl.u32 %v113, 7
    %v115 = vsub.s32 0, %v114
    %v116 = vrot.slane %v108, %v115
    %v117 = vmul.f32 %v111, %v116
    %v118 = vadd.f32 %v96, %v117
    %v119 = vadd.f32 %v118, %v107
    %v120 = vmul.f32 %v119, 0.5
    %v121 = vtanh.pop %v120
    %v122 = vadd.f32 %v121, 1.0
    %v123 = vmul.f32 %v122, 0.5
    %v124 = vld [vmem:[#allocation2 + $0xe] sm:$0x1]
    %v125 = vld [vmem:[#allocation2 + $0x9] sm:$0x1]
    %127 = vset.pattern.permute.xlu0 0
    %128 = vperm.xlu0 %127, %v123
    %v129 = vpop.permute.xlu0 %128
    %v131 = vlaneseq
    %v132 = vshrl.u32 %v131, 7
    %v133 = vsub.s32 0, %v132
    %v134 = vrot.slane %v125, %v133
    %v135 = vmul.f32 %v129, %v134
    %v136 = vlaneseq
    %v137 = vshrl.u32 %v136, 7
    %v138 = vsub.s32 0, %v137
    %v139 = vrot.slane %v124, %v138
    %v140 = vadd.f32 %v139, %v135
    %v141 = vld [vmem:[#allocation2 + $0xa] sm:$0x1]
    %142 = vset.pattern.permute.xlu0 1
    %143 = vperm.xlu0 %142, %v123
    %v144 = vpop.permute.xlu0 %143
    %v146 = vlaneseq
    %v147 = vshrl.u32 %v146, 7
    %v148 = vsub.s32 0, %v147
    %v149 = vrot.slane %v141, %v148
    %v150 = vmul.f32 %v144, %v149
    %v151 = vld [vmem:[#allocation2 + $0xb] sm:$0x1]
    %152 = vset.pattern.permute.xlu0 2
    %153 = vperm.xlu0 %152, %v123
    %v154 = vpop.permute.xlu0 %153
    %v156 = vlaneseq
    %v157 = vshrl.u32 %v156, 7
    %v158 = vsub.s32 0, %v157
    %v159 = vrot.slane %v151, %v158
    %v160 = vmul.f32 %v154, %v159
    %v161 = vadd.f32 %v140, %v160
    %v162 = vld [vmem:[#allocation2 + $0xc] sm:$0x1]
    %163 = vset.pattern.permute.xlu0 3
    %164 = vperm.xlu0 %163, %v123
    %v165 = vpop.permute.xlu0 %164
    %v167 = vlaneseq
    %v168 = vshrl.u32 %v167, 7
    %v169 = vsub.s32 0, %v168
    %v170 = vrot.slane %v162, %v169
    %v171 = vmul.f32 %v165, %v170
    %v172 = vadd.f32 %v150, %v171
    %v173 = vld [vmem:[#allocation2 + $0xd] sm:$0x1]
    %174 = vset.pattern.permute.xlu0 4
    %175 = vperm.xlu0 %174, %v123
    %v176 = vpop.permute.xlu0 %175
    %v178 = vlaneseq
    %v179 = vshrl.u32 %v178, 7
    %v180 = vsub.s32 0, %v179
    %v181 = vrot.slane %v173, %v180
    %v182 = vmul.f32 %v176, %v181
    %v183 = vadd.f32 %v161, %v182
    %v184 = vadd.f32 %v183, %v172
    %v185 = vrot.slane %v184, 4
    %v186 = vmax.f32 %v184, %v185
    %v187 = vrot.slane %v186, 2
    %v188 = vmax.f32 %v186, %v187
    %v189 = vrot.slane %v188, 1
    %v190 = vmax.f32 %v188, %v189
    %v191 = vsub.f32 %v184, %v190
    %v192 = vmul.f32 %v191, 1.442695
    %v193 = vpow.pop %v192
    %v194 = vrot.slane %v193, 4
    %v195 = vadd.f32 %v193, %v194
    %v196 = vrot.slane %v195, 2
    %v197 = vadd.f32 %v195, %v196
    %v198 = vrot.slane %v197, 1
    %v199 = vadd.f32 %v197, %v198
    %v200 = vrcp.pop %v199
    %v201 = vmul.f32 %v193, %v200
    %202 = vst [vmem:[#allocation5] sm:$0xff] %v201
    // Predicated region
    $region14: #{tpu_custom_call.1} parent=1 // pred_check
      _
    $region15: #{tpu_custom_call.1} parent=1 // pred_check_branch
      %204 = sbr.rel (0) target = $region17
    $region16: #{tpu_custom_call.1} parent=1 // pred_region
      %s206 = ssub.s32 128, 128
      %207 = vsyncadd [#allocation4], %s206
      %s209 = sshll.u32 [#allocation5], 4
      %s210 = int_to_ptr.vmem [resolvable:$true] %s209
      %212 = dma.vmem_to_hbm [thread:$0]  %s210, 128, %s2, [#allocation4]
    $region17: #{tpu_custom_call.1} parent=1 // pred_fallthru
      _
    // Predicated region
    $region18: #{tpu_custom_call.1} parent=1 // pred_check
      _
    $region19: #{tpu_custom_call.1} parent=1 // pred_check_branch
      %214 = sbr.rel (0) target = $region21
    $region20: #{tpu_custom_call.1} parent=1 // pred_region
      %215 = dma.done [#allocation4], 128
    $region21: #{tpu_custom_call.1} parent=1 // pred_fallthru
      _
    %216 = vsyncpa [#allocation3], 1
    %217 = vsyncpa [#allocation4], 1

</llo_original>
